<compile_context>
chip_gen: v7x
topology: tpu7x:2x2x1
jax: 0.10.0
libtpu: 0.0.40
codegen_flags: <defaults>
</compile_context>

<pallas_src>
import functools

import jax
import jax.numpy as jnp
from jax.experimental import pallas as pl
from jax.experimental.pallas import tpu as pltpu

_VMEM = pltpu.MemorySpace.VMEM
_MAX_TILE = 1024  # rows per batch tile; 512-1024 is the measured HBM-roofline sweet spot


def mlp_kernel(x_ref, w1_ref, b1_ref, w2_ref, b2_ref, o_ref):
    # Layer 1: x @ W1 + b1, ReLU.  MXU matmul with f32 accumulation.
    h = jnp.dot(x_ref[...], w1_ref[...], preferred_element_type=jnp.float32)
    h = jnp.maximum(h + b1_ref[...], 0.0)                     # (tb, H) + (1, H), VPU ReLU
    # Layer 2: h @ W2 + b2 (cast h back to the storage dtype so bf16 params
    # take the native bf16 MXU path; no-op for f32).
    y = jnp.dot(h.astype(w2_ref.dtype), w2_ref[...],
                preferred_element_type=jnp.float32)
    o_ref[...] = (y + b2_ref[...]).astype(o_ref.dtype)


def prepare_params(w1, b1, w2, b2, dtype=jnp.float32):
    """One-time conversion from PyTorch (out, in) Linear layout to kernel layout.

    Call ONCE at model-init time. Pass dtype=jnp.bfloat16 to store parameters
    (and run the matmuls) in bf16 with f32 accumulation.
    """
    w1_t = jnp.asarray(w1).T.astype(dtype)            # (D, H)
    w2_t = jnp.asarray(w2).T.astype(dtype)            # (H, D)
    b1_r = jnp.asarray(b1).reshape(1, -1).astype(dtype)   # (1, H)
    b2_r = jnp.asarray(b2).reshape(1, -1).astype(dtype)   # (1, D)
    return w1_t, b1_r, w2_t, b2_r


def _round_up(n, m):
    return ((n + m - 1) // m) * m


def _pick_tile(B):
    # Largest tile <= _MAX_TILE that still leaves >= 2 grid steps (so the
    # "parallel" batch axis can shard across v7x's 2 TensorCores).
    tb = min(_MAX_TILE, _round_up(pl.cdiv(B, 2), 8))
    return max(tb, 8)


def _cost_estimate(B, D, H, bytes_el):
    flops = 4 * B * D * H  # two (M,K)x(K,N) matmuls: 2*B*D*H each
    bytes_accessed = 2 * B * D * bytes_el + (D * H + H * D + H + D) * bytes_el
    return pl.CostEstimate(flops=flops, transcendentals=0,
                           bytes_accessed=bytes_accessed)


def _vmem_limit_bytes(tb, D, H, bytes_el):
    stream = 2 * 2 * tb * D * bytes_el                     # double-buffered x and y tiles
    weights = 2 * (D * H + H * D + H + D) * bytes_el       # resident params (x2 buffers)
    hidden = tb * H * 4                                    # f32 intermediate
    return int(stream + weights + hidden) + (8 << 20)      # + compiler scratch headroom


def _forward_small(x, w1_t, b1_r, w2_t, b2_r):
    """Grid-less path for small batches: everything resident in VMEM, one shot."""
    B, D = x.shape
    H = w1_t.shape[1]
    return pl.pallas_call(
        mlp_kernel,
        out_shape=jax.ShapeDtypeStruct((B, D), x.dtype),
        in_specs=[pl.BlockSpec(memory_space=_VMEM)] * 5,
        out_specs=pl.BlockSpec(memory_space=_VMEM),
        cost_estimate=_cost_estimate(B, D, H, x.dtype.itemsize),
    )(x, w1_t, b1_r, w2_t, b2_r)


def _forward_tiled(x, w1_t, b1_r, w2_t, b2_r, *, tb):
    """Batch-tiled path: weights stay resident, batch tiles stream (pipelined).

    grid = cdiv(B, tb): the partial tail block is masked by Pallas, so any
    large B (divisible or not) takes the pipelined path.
    """
    B, D = x.shape
    H = w1_t.shape[1]
    bytes_el = x.dtype.itemsize
    return pl.pallas_call(
        mlp_kernel,
        out_shape=jax.ShapeDtypeStruct((B, D), x.dtype),
        grid_spec=pl.GridSpec(
            grid=(pl.cdiv(B, tb),),
            in_specs=[
                pl.BlockSpec((tb, D), lambda i: (i, 0)),   # activations: stream
                pl.BlockSpec((D, H), lambda i: (0, 0)),    # weights: resident
                pl.BlockSpec((1, H), lambda i: (0, 0)),
                pl.BlockSpec((H, D), lambda i: (0, 0)),
                pl.BlockSpec((1, D), lambda i: (0, 0)),
            ],
            out_specs=pl.BlockSpec((tb, D), lambda i: (i, 0)),
        ),
        compiler_params=pltpu.CompilerParams(
            dimension_semantics=("parallel",),
            vmem_limit_bytes=_vmem_limit_bytes(tb, D, H, bytes_el),
        ),
        cost_estimate=_cost_estimate(B, D, H, bytes_el),
    )(x, w1_t, b1_r, w2_t, b2_r)


@jax.jit
def simple_neural_network(x, w1_t, b1_r, w2_t, b2_r):
    """Forward pass. Parameters must already be in kernel layout (prepare_params)."""
    x = x.astype(w1_t.dtype)       # bf16 storage path casts once at entry
    B = x.shape[0]
    if B <= _MAX_TILE:
        return _forward_small(x, w1_t, b1_r, w2_t, b2_r)
    return _forward_tiled(x, w1_t, b1_r, w2_t, b2_r, tb=_pick_tile(B))


if __name__ == "__main__":
    # Shapes consistent with the module: input_size = 128, hidden = 2 * 128.
    B = 8
    D = 128
    H = 2 * D

    key = jax.random.PRNGKey(0)
    kx, kw1, kb1, kw2, kb2, kx2 = jax.random.split(key, 6)

    x = jax.random.normal(kx, (B, D), dtype=jnp.float32)

    # PyTorch-layout parameters (out_features, in_features), nn.Linear-style init.
    bound1 = 1.0 / jnp.sqrt(jnp.float32(D))
    w1 = jax.random.uniform(kw1, (H, D), jnp.float32, -bound1, bound1)
    b1 = jax.random.uniform(kb1, (H,), jnp.float32, -bound1, bound1)
    bound2 = 1.0 / jnp.sqrt(jnp.float32(H))
    w2 = jax.random.uniform(kw2, (D, H), jnp.float32, -bound2, bound2)
    b2 = jax.random.uniform(kb2, (D,), jnp.float32, -bound2, bound2)

    # --- f32 path, small batch (grid-less, bit-parity with PyTorch) --------
    params_f32 = prepare_params(w1, b1, w2, b2, dtype=jnp.float32)
    out = jax.block_until_ready(simple_neural_network(x, *params_f32))
    ref = jnp.maximum(x @ w1.T + b1, 0.0) @ w2.T + b2
    assert out.shape == (B, D)
    assert jnp.allclose(out, ref, atol=1e-4, rtol=1e-4)

    # --- tiled path, large non-divisible batch (cdiv grid + tail masking) --
    B_big = 2060  # > _MAX_TILE, not a multiple of the tile (or even of 8)
    x_big = jax.random.normal(kx2, (B_big, D), dtype=jnp.float32)
    out_big = jax.block_until_ready(simple_neural_network(x_big, *params_f32))
    ref_big = jnp.maximum(x_big @ w1.T + b1, 0.0) @ w2.T + b2
    assert out_big.shape == (B_big, D)
    assert jnp.allclose(out_big, ref_big, atol=1e-4, rtol=1e-4)

    # --- bf16 storage / bf16-MXU path (f32 accumulation), looser tolerance -
    params_bf16 = prepare_params(w1, b1, w2, b2, dtype=jnp.bfloat16)
    out_bf16 = jax.block_until_ready(simple_neural_network(x_big, *params_bf16))
    assert out_bf16.shape == (B_big, D)
    assert jnp.allclose(out_bf16.astype(jnp.float32), ref_big, atol=7.5e-2, rtol=5e-2)

    print("KERNEL_OK")
</pallas_src>

<mosaic_0001>
module attributes {stable_mosaic.version = 11 : i64} {
  func.func @mlp_kernel(%arg0: memref<8x128xf32, #tpu.memory_space<vmem>>, %arg1: memref<128x256xf32, #tpu.memory_space<vmem>>, %arg2: memref<1x256xf32, #tpu.memory_space<vmem>>, %arg3: memref<256x128xf32, #tpu.memory_space<vmem>>, %arg4: memref<1x128xf32, #tpu.memory_space<vmem>>, %arg5: memref<8x128xf32, #tpu.memory_space<vmem>>) attributes {dimension_semantics = [], scalar_prefetch = 0 : i64, scratch_operands = 0 : i64, tpu.core_type = #tpu.core_type<tc>} {
    %c0 = arith.constant 0 : index
    %c0_0 = arith.constant 0 : index
    %0 = vector.load %arg0[%c0, %c0_0] : memref<8x128xf32, #tpu.memory_space<vmem>>, vector<8x128xf32>
    %c0_1 = arith.constant 0 : index
    %c0_2 = arith.constant 0 : index
    %1 = vector.load %arg1[%c0_1, %c0_2] : memref<128x256xf32, #tpu.memory_space<vmem>>, vector<128x256xf32>
    %cst = arith.constant dense<0.000000e+00> : vector<8x256xf32>
    %2 = tpu.matmul %0, %1, %cst {dimension_numbers = #tpu.dot_dimension_numbers<[1], [0], [0], [1], [0, 0, 1, 1], [], []>} : vector<8x128xf32>, vector<128x256xf32>, vector<8x256xf32> -> vector<8x256xf32>
    %c0_3 = arith.constant 0 : index
    %c0_4 = arith.constant 0 : index
    %3 = vector.load %arg2[%c0_3, %c0_4] : memref<1x256xf32, #tpu.memory_space<vmem>>, vector<1x256xf32>
    %4 = vector.broadcast %3 : vector<1x256xf32> to vector<8x256xf32>
    %5 = arith.addf %2, %4 : vector<8x256xf32>
    %cst_5 = arith.constant 0.000000e+00 : f32
    %6 = vector.broadcast %cst_5 : f32 to vector<8x256xf32>
    %7 = arith.maximumf %5, %6 : vector<8x256xf32>
    %c0_6 = arith.constant 0 : index
    %c0_7 = arith.constant 0 : index
    %8 = vector.load %arg3[%c0_6, %c0_7] : memref<256x128xf32, #tpu.memory_space<vmem>>, vector<256x128xf32>
    %cst_8 = arith.constant dense<0.000000e+00> : vector<8x128xf32>
    %9 = tpu.matmul %7, %8, %cst_8 {dimension_numbers = #tpu.dot_dimension_numbers<[1], [0], [0], [1], [0, 0, 1, 1], [], []>} : vector<8x256xf32>, vector<256x128xf32>, vector<8x128xf32> -> vector<8x128xf32>
    %c0_9 = arith.constant 0 : index
    %c0_10 = arith.constant 0 : index
    %10 = vector.load %arg4[%c0_9, %c0_10] : memref<1x128xf32, #tpu.memory_space<vmem>>, vector<1x128xf32>
    %11 = vector.broadcast %10 : vector<1x128xf32> to vector<8x128xf32>
    %12 = arith.addf %9, %11 : vector<8x128xf32>
    %c0_11 = arith.constant 0 : index
    %c0_12 = arith.constant 0 : index
    %13 = vector.load %arg5[%c0_11, %c0_12] : memref<8x128xf32, #tpu.memory_space<vmem>>, vector<8x128xf32>
    tpu.vector_store %arg5[%c0_11, %c0_12], %12 {strides = array<i32>} : memref<8x128xf32, #tpu.memory_space<vmem>>, vector<8x128xf32>,
    return
  }
}

</mosaic_0001>

<llo_original>
// kernel: simple_neural_network.1
$region0: #{simple_neural_network.1}
  #allocation0 [shape = 'u32[]', space=smem, size = 0x4, offset = 0x4, fixed_abs, tag = 'smem constant byte address 0x4 - core index']
  #allocation1 [shape = 'u32[144,128]{1,0:T(1,128)}', space=vmem, size = 0x12000, scoped, tag = 'internal scratch']
  %s0 = inlined_call_operand.hbm [shape: f32[8,128], index: 0, kind: input, shape index: {}]
  %s1 = inlined_call_operand.hbm [shape: f32[128,256], index: 1, kind: input, shape index: {}]
  %s2 = inlined_call_operand.vmem [shape: f32[1,256], index: 2, kind: input, shape index: {}]
  %s3 = inlined_call_operand.hbm [shape: f32[256,128], index: 3, kind: input, shape index: {}]
  %s4 = inlined_call_operand.vmem [shape: f32[1,128], index: 4, kind: input, shape index: {}]
  %s5 = inlined_call_operand.hbm [shape: f32[8,128], index: 5, kind: output, shape index: {}]
  %s6 = sld [smem:[#allocation0]]
  $region42: #{simple_neural_network.1} parent=0
    _
  %s8 = ssub.s32 1, %s6
  %s9 = scalar_select 0, %s8, %s6
  $region1: #{simple_neural_network.1} parent=0
    #allocation2 [shape = 'u8[4096]{0}', space=vmem, size = 0x1000, scoped, tag = 'input window, operand 0, single buffered']
    #allocation3 [shape = 's32[1]{0}', space=sflag, size = 0x4, scoped, tag = 'scoped memory for simple_neural_network.1']
    #allocation4 [shape = 's32[1]{0}', space=sflag, size = 0x4, scoped, tag = 'scoped memory for simple_neural_network.1']
    #allocation5 [shape = 'u8[131072]{0}', space=vmem, size = 0x20000, scoped, tag = 'input window, operand 1, single buffered']
    #allocation6 [shape = 's32[1]{0}', space=sflag, size = 0x4, scoped, tag = 'scoped memory for simple_neural_network.1']
    #allocation7 [shape = 'u8[131072]{0}', space=vmem, size = 0x20000, scoped, tag = 'input window, operand 3, single buffered']
    #allocation8 [shape = 'u8[4096]{0}', space=vmem, size = 0x1000, scoped, tag = 'output window, operand 0, single buffered']
    %10 = vsyncpa [#allocation3], 0
    %11 = vsyncpa [#allocation6], 0
    %12 = vsyncpa [#allocation4], 0
    // Predicated region
    $region2: #{simple_neural_network.1} parent=1 // pred_check
      _
    $region3: #{simple_neural_network.1} parent=1 // pred_check_branch
      %14 = sbr.rel (0) target = $region5
    $region4: #{simple_neural_network.1} parent=1 // pred_region
      %s16 = ssub.s32 128, 128
      %17 = vsyncadd [#allocation3], %s16
      %s19 = sshll.u32 [#allocation2], 4
      %s20 = int_to_ptr.vmem [resolvable:$true] %s19
      %22 = dma.hbm_to_vmem [thread:$0]  %s0, 128, %s20, [#allocation3]
    $region5: #{simple_neural_network.1} parent=1 // pred_fallthru
      _
    // Predicated region
    $region6: #{simple_neural_network.1} parent=1 // pred_check
      _
    $region7: #{simple_neural_network.1} parent=1 // pred_check_branch
      %24 = sbr.rel (0) target = $region9
    $region8: #{simple_neural_network.1} parent=1 // pred_region
      %s26 = ssub.s32 4096, 4096
      %27 = vsyncadd [#allocation6], %s26
      %s28 = sshll.u32 [#allocation5], 4
      %s29 = int_to_ptr.vmem [resolvable:$true] %s28
      %34 = dma.hbm_to_vmem [thread:$0]  %s1, 4096, %s29, [#allocation6], 256, 256, 16
    $region9: #{simple_neural_network.1} parent=1 // pred_fallthru
      _
    // Predicated region
    $region10: #{simple_neural_network.1} parent=1 // pred_check
      _
    $region11: #{simple_neural_network.1} parent=1 // pred_check_branch
      %36 = sbr.rel (0) target = $region13
    $region12: #{simple_neural_network.1} parent=1 // pred_region
      _
    $region13: #{simple_neural_network.1} parent=1 // pred_fallthru
      _
    // Predicated region
    $region14: #{simple_neural_network.1} parent=1 // pred_check
      _
    $region15: #{simple_neural_network.1} parent=1 // pred_check_branch
      %38 = sbr.rel (0) target = $region17
    $region16: #{simple_neural_network.1} parent=1 // pred_region
      %s40 = ssub.s32 4096, 4096
      %41 = vsyncadd [#allocation6], %s40
      %s42 = sshll.u32 [#allocation7], 4
      %s43 = int_to_ptr.vmem [resolvable:$true] %s42
      %48 = dma.hbm_to_vmem [thread:$0]  %s3, 4096, %s43, [#allocation6], 128, 128, 8
    $region17: #{simple_neural_network.1} parent=1 // pred_fallthru
      _
    // Predicated region
    $region18: #{simple_neural_network.1} parent=1 // pred_check
      _
    $region19: #{simple_neural_network.1} parent=1 // pred_check_branch
      %50 = sbr.rel (0) target = $region21
    $region20: #{simple_neural_network.1} parent=1 // pred_region
      _
    $region21: #{simple_neural_network.1} parent=1 // pred_fallthru
      _
    // Predicated region
    $region22: #{simple_neural_network.1} parent=1 // pred_check
      _
    $region23: #{simple_neural_network.1} parent=1 // pred_check_branch
      %52 = sbr.rel (0) target = $region25
    $region24: #{simple_neural_network.1} parent=1 // pred_region
      %53 = dma.done [#allocation3], 128
    $region25: #{simple_neural_network.1} parent=1 // pred_fallthru
      _
    // Predicated region
    $region26: #{simple_neural_network.1} parent=1 // pred_check
      _
    $region27: #{simple_neural_network.1} parent=1 // pred_check_branch
      %55 = sbr.rel (0) target = $region29
    $region28: #{simple_neural_network.1} parent=1 // pred_region
      %56 = dma.done [#allocation6], 4096
    $region29: #{simple_neural_network.1} parent=1 // pred_fallthru
      _
    // Predicated region
    $region30: #{simple_neural_network.1} parent=1 // pred_check
      _
    $region31: #{simple_neural_network.1} parent=1 // pred_check_branch
      %58 = sbr.rel (0) target = $region33
    $region32: #{simple_neural_network.1} parent=1 // pred_region
      %59 = dma.done [#allocation6], 4096
    $region33: #{simple_neural_network.1} parent=1 // pred_fallthru
      _
    %v60 = vld [vmem:[#allocation2] sm:$0xff]
    %v61 = vld [vmem:[#allocation5] sm:$0xff]
    %v62 = vld [vmem:[#allocation5 + $0x8] sm:$0xff]
    %v63 = vld [vmem:[#allocation5 + $0x10] sm:$0xff]
    %v64 = vld [vmem:[#allocation5 + $0x18] sm:$0xff]
    %v65 = vld [vmem:[#allocation5 + $0x20] sm:$0xff]
    %v66 = vld [vmem:[#allocation5 + $0x28] sm:$0xff]
    %v67 = vld [vmem:[#allocation5 + $0x30] sm:$0xff]
    %v68 = vld [vmem:[#allocation5 + $0x38] sm:$0xff]
    %v69 = vld [vmem:[#allocation5 + $0x40] sm:$0xff]
    %v70 = vld [vmem:[#allocation5 + $0x48] sm:$0xff]
    %v71 = vld [vmem:[#allocation5 + $0x50] sm:$0xff]
    %v72 = vld [vmem:[#allocation5 + $0x58] sm:$0xff]
    %v73 = vld [vmem:[#allocation5 + $0x60] sm:$0xff]
    %v74 = vld [vmem:[#allocation5 + $0x68] sm:$0xff]
    %v75 = vld [vmem:[#allocation5 + $0x70] sm:$0xff]
    %v76 = vld [vmem:[#allocation5 + $0x78] sm:$0xff]
    %v77 = vld [vmem:[#allocation5 + $0x80] sm:$0xff]
    %v78 = vld [vmem:[#allocation5 + $0x88] sm:$0xff]
    %v79 = vld [vmem:[#allocation5 + $0x90] sm:$0xff]
    %v80 = vld [vmem:[#allocation5 + $0x98] sm:$0xff]
    %v81 = vld [vmem:[#allocation5 + $0xa0] sm:$0xff]
    %v82 = vld [vmem:[#allocation5 + $0xa8] sm:$0xff]
    %v83 = vld [vmem:[#allocation5 + $0xb0] sm:$0xff]
    %v84 = vld [vmem:[#allocation5 + $0xb8] sm:$0xff]
    %v85 = vld [vmem:[#allocation5 + $0xc0] sm:$0xff]
    %v86 = vld [vmem:[#allocation5 + $0xc8] sm:$0xff]
    %v87 = vld [vmem:[#allocation5 + $0xd0] sm:$0xff]
    %v88 = vld [vmem:[#allocation5 + $0xd8] sm:$0xff]
    %v89 = vld [vmem:[#allocation5 + $0xe0] sm:$0xff]
    %v90 = vld [vmem:[#allocation5 + $0xe8] sm:$0xff]
    %v91 = vld [vmem:[#allocation5 + $0xf0] sm:$0xff]
    %v92 = vld [vmem:[#allocation5 + $0xf8] sm:$0xff]
    %v93 = vld [vmem:[%s2] sm:$0x3]
    %v95 = vlaneseq
    %v96 = vshrl.u32 %v95, 7
    %v97 = vsub.s32 0, %v96
    %v98 = vrot.slane %v93, %v97
    %v99 = vlaneseq
    %v100 = vshrl.u32 %v99, 7
    %v101 = vsub.s32 1, %v100
    %v102 = vrot.slane %v93, %v101
    %105 = vmatprep.subr.mxu0 %v62
    %106 = vmatpush1.msra.mxu0 %v61
    %107 = vmatprep.subr.mxu0 %v64
    %108 = vmatpush1.msra.mxu0 %v63
    %109 = vmatprep.subr.mxu0 %v66
    %110 = vmatpush1.msra.mxu0 %v65
    %111 = vmatprep.subr.mxu0 %v68
    %112 = vmatpush1.msra.mxu0 %v67
    %113 = vmatprep.subr.mxu0 %v70
    %114 = vmatpush1.msra.mxu0 %v69
    %115 = vmatprep.subr.mxu0 %v72
    %116 = vmatpush1.msra.mxu0 %v71
    %117 = vmatprep.subr.mxu0 %v74
    %118 = vmatpush1.msra.mxu0 %v73
    %119 = vmatprep.subr.mxu0 %v76
    %120 = vmatpush1.msra.mxu0 %v75
    %121 = vmatprep.subr.mxu0 %v78
    %122 = vmatpush1.msra.mxu0 %v77
    %123 = vmatprep.subr.mxu0 %v80
    %124 = vmatpush1.msra.mxu0 %v79
    %125 = vmatprep.subr.mxu0 %v82
    %126 = vmatpush1.msra.mxu0 %v81
    %127 = vmatprep.subr.mxu0 %v84
    %128 = vmatpush1.msra.mxu0 %v83
    %129 = vmatprep.subr.mxu0 %v86
    %130 = vmatpush1.msra.mxu0 %v85
    %131 = vmatprep.subr.mxu0 %v88
    %132 = vmatpush1.msra.mxu0 %v87
    %133 = vmatprep.subr.mxu0 %v90
    %134 = vmatpush1.msra.mxu0 %v89
    %135 = vmatprep.subr.mxu0 %v92
    %136 = vmatpush1.msra.mxu0 %v91
    %137 = vmatprep.subr.mxu0 0.0
    %138 = vmatpush1.msra.mxu0 0.0
    %139 = vmatprep.subr.mxu0 0.0
    %140 = vmatpush1.msra.mxu0 0.0
    %141 = vmatprep.subr.mxu0 0.0
    %142 = vmatpush1.msra.mxu0 0.0
    %143 = vmatprep.subr.mxu0 0.0
    %144 = vmatpush1.msra.mxu0 0.0
    %145 = vmatprep.subr.mxu0 0.0
    %146 = vmatpush1.msra.mxu0 0.0
    %147 = vmatprep.subr.mxu0 0.0
    %148 = vmatpush1.msra.mxu0 0.0
    %149 = vmatprep.subr.mxu0 0.0
    %150 = vmatpush1.msra.mxu0 0.0
    %151 = vmatprep.subr.mxu0 0.0
    %152 = vmatpush1.msra.mxu0 0.0
    %153 = vmatprep.subr.mxu0 0.0
    %154 = vmatpush1.msra.mxu0 0.0
    %155 = vmatprep.subr.mxu0 0.0
    %156 = vmatpush1.msra.mxu0 0.0
    %157 = vmatprep.subr.mxu0 0.0
    %158 = vmatpush1.msra.mxu0 0.0
    %159 = vmatprep.subr.mxu0 0.0
    %160 = vmatpush1.msra.mxu0 0.0
    %161 = vmatprep.subr.mxu0 0.0
    %162 = vmatpush1.msra.mxu0 0.0
    %163 = vmatprep.subr.mxu0 0.0
    %164 = vmatpush1.msra.mxu0 0.0
    %165 = vmatprep.subr.mxu0 0.0
    %166 = vmatpush1.msra.mxu0 0.0
    %167 = vmatprep.subr.mxu0 0.0
    %168 = vmatpush1.msra.mxu0 0.0
    %169 = vmatprep.mubr.f32.mxu0 0.0
    %170 = vmatmul.mubr.f32.gmra.mrb[0].mxu0 %v60
    %v171 = vpop.f32.mrb[0].mxu0
    %v172 = vadd.f32 %v98, %v171
    %v173 = vpop.f32.mrb[0].mxu0
    %v174 = vadd.f32 %v102, %v173
    %175 = vdwg.mxu0
    %v176 = vmax.f32 %v172, 0.0
    %v177 = vmax.f32 %v174, 0.0
    %v178 = vld [vmem:[#allocation7] sm:$0xff]
    %v179 = vld [vmem:[#allocation7 + $0x8] sm:$0xff]
    %v180 = vld [vmem:[#allocation7 + $0x10] sm:$0xff]
    %v181 = vld [vmem:[#allocation7 + $0x18] sm:$0xff]
    %v182 = vld [vmem:[#allocation7 + $0x20] sm:$0xff]
    %v183 = vld [vmem:[#allocation7 + $0x28] sm:$0xff]
    %v184 = vld [vmem:[#allocation7 + $0x30] sm:$0xff]
    %v185 = vld [vmem:[#allocation7 + $0x38] sm:$0xff]
    %v186 = vld [vmem:[#allocation7 + $0x40] sm:$0xff]
    %v187 = vld [vmem:[#allocation7 + $0x48] sm:$0xff]
    %v188 = vld [vmem:[#allocation7 + $0x50] sm:$0xff]
    %v189 = vld [vmem:[#allocation7 + $0x58] sm:$0xff]
    %v190 = vld [vmem:[#allocation7 + $0x60] sm:$0xff]
    %v191 = vld [vmem:[#allocation7 + $0x68] sm:$0xff]
    %v192 = vld [vmem:[#allocation7 + $0x70] sm:$0xff]
    %v193 = vld [vmem:[#allocation7 + $0x78] sm:$0xff]
    %v194 = vld [vmem:[#allocation7 + $0x80] sm:$0xff]
    %v195 = vld [vmem:[#allocation7 + $0x88] sm:$0xff]
    %v196 = vld [vmem:[#allocation7 + $0x90] sm:$0xff]
    %v197 = vld [vmem:[#allocation7 + $0x98] sm:$0xff]
    %v198 = vld [vmem:[#allocation7 + $0xa0] sm:$0xff]
    %v199 = vld [vmem:[#allocation7 + $0xa8] sm:$0xff]
    %v200 = vld [vmem:[#allocation7 + $0xb0] sm:$0xff]
    %v201 = vld [vmem:[#allocation7 + $0xb8] sm:$0xff]
    %v202 = vld [vmem:[#allocation7 + $0xc0] sm:$0xff]
    %v203 = vld [vmem:[#allocation7 + $0xc8] sm:$0xff]
    %v204 = vld [vmem:[#allocation7 + $0xd0] sm:$0xff]
    %v205 = vld [vmem:[#allocation7 + $0xd8] sm:$0xff]
    %v206 = vld [vmem:[#allocation7 + $0xe0] sm:$0xff]
    %v207 = vld [vmem:[#allocation7 + $0xe8] sm:$0xff]
    %v208 = vld [vmem:[#allocation7 + $0xf0] sm:$0xff]
    %v209 = vld [vmem:[#allocation7 + $0xf8] sm:$0xff]
    %v210 = vld [vmem:[%s4] sm:$0x1]
    %v212 = vlaneseq
    %v213 = vshrl.u32 %v212, 7
    %v214 = vsub.s32 0, %v213
    %v215 = vrot.slane %v210, %v214
    %217 = vmatprep.subr.mxu0 0.0
    %218 = vmatpush1.msra.mxu0 %v178
    %219 = vmatprep.subr.mxu0 0.0
    %220 = vmatpush1.msra.mxu0 %v179
    %221 = vmatprep.subr.mxu0 0.0
    %222 = vmatpush1.msra.mxu0 %v180
    %223 = vmatprep.subr.mxu0 0.0
    %224 = vmatpush1.msra.mxu0 %v181
    %225 = vmatprep.subr.mxu0 0.0
    %226 = vmatpush1.msra.mxu0 %v182
    %227 = vmatprep.subr.mxu0 0.0
    %228 = vmatpush1.msra.mxu0 %v183
    %229 = vmatprep.subr.mxu0 0.0
    %230 = vmatpush1.msra.mxu0 %v184
    %231 = vmatprep.subr.mxu0 0.0
    %232 = vmatpush1.msra.mxu0 %v185
    %233 = vmatprep.subr.mxu0 0.0
    %234 = vmatpush1.msra.mxu0 %v186
    %235 = vmatprep.subr.mxu0 0.0
    %236 = vmatpush1.msra.mxu0 %v187
    %237 = vmatprep.subr.mxu0 0.0
    %238 = vmatpush1.msra.mxu0 %v188
    %239 = vmatprep.subr.mxu0 0.0
    %240 = vmatpush1.msra.mxu0 %v189
    %241 = vmatprep.subr.mxu0 0.0
    %242 = vmatpush1.msra.mxu0 %v190
    %243 = vmatprep.subr.mxu0 0.0
    %244 = vmatpush1.msra.mxu0 %v191
    %245 = vmatprep.subr.mxu0 0.0
    %246 = vmatpush1.msra.mxu0 %v192
    %247 = vmatprep.subr.mxu0 0.0
    %248 = vmatpush1.msra.mxu0 %v193
    %249 = vmatprep.subr.mxu0 0.0
    %250 = vmatpush1.msra.mxu0 %v194
    %251 = vmatprep.subr.mxu0 0.0
    %252 = vmatpush1.msra.mxu0 %v195
    %253 = vmatprep.subr.mxu0 0.0
    %254 = vmatpush1.msra.mxu0 %v196
    %255 = vmatprep.subr.mxu0 0.0
    %256 = vmatpush1.msra.mxu0 %v197
    %257 = vmatprep.subr.mxu0 0.0
    %258 = vmatpush1.msra.mxu0 %v198
    %259 = vmatprep.subr.mxu0 0.0
    %260 = vmatpush1.msra.mxu0 %v199
    %261 = vmatprep.subr.mxu0 0.0
    %262 = vmatpush1.msra.mxu0 %v200
    %263 = vmatprep.subr.mxu0 0.0
    %264 = vmatpush1.msra.mxu0 %v201
    %265 = vmatprep.subr.mxu0 0.0
    %266 = vmatpush1.msra.mxu0 %v202
    %267 = vmatprep.subr.mxu0 0.0
    %268 = vmatpush1.msra.mxu0 %v203
    %269 = vmatprep.subr.mxu0 0.0
    %270 = vmatpush1.msra.mxu0 %v204
    %271 = vmatprep.subr.mxu0 0.0
    %272 = vmatpush1.msra.mxu0 %v205
    %273 = vmatprep.subr.mxu0 0.0
    %274 = vmatpush1.msra.mxu0 %v206
    %275 = vmatprep.subr.mxu0 0.0
    %276 = vmatpush1.msra.mxu0 %v207
    %277 = vmatprep.subr.mxu0 0.0
    %278 = vmatpush1.msra.mxu0 %v208
    %279 = vmatprep.subr.mxu0 0.0
    %280 = vmatpush1.msra.mxu0 %v209
    %281 = vmatprep.mubr.f32.mxu0 %v177
    %282 = vmatmul.mubr.f32.gmra.mrb[0].mxu0 %v176
    %v283 = vpop.f32.mrb[0].mxu0
    %v284 = vadd.f32 %v215, %v283
    %v285 = vpop.f32.mrb[0].mxu0
    %286 = vdwg.mxu0
    %287 = vst [vmem:[#allocation8] sm:$0xff] %v284
    // Predicated region
    $region34: #{simple_neural_network.1} parent=1 // pred_check
      _
    $region35: #{simple_neural_network.1} parent=1 // pred_check_branch
      %289 = sbr.rel (0) target = $region37
    $region36: #{simple_neural_network.1} parent=1 // pred_region
      %s291 = ssub.s32 128, 128
      %292 = vsyncadd [#allocation4], %s291
      %s294 = sshll.u32 [#allocation8], 4
      %s295 = int_to_ptr.vmem [resolvable:$true] %s294
      %297 = dma.vmem_to_hbm [thread:$0]  %s295, 128, %s5, [#allocation4]
    $region37: #{simple_neural_network.1} parent=1 // pred_fallthru
      _
    // Predicated region
    $region38: #{simple_neural_network.1} parent=1 // pred_check
      _
    $region39: #{simple_neural_network.1} parent=1 // pred_check_branch
      %299 = sbr.rel (0) target = $region41
    $region40: #{simple_neural_network.1} parent=1 // pred_region
      %300 = dma.done [#allocation4], 128
    $region41: #{simple_neural_network.1} parent=1 // pred_fallthru
      _
    %301 = vsyncpa [#allocation3], 1
    %302 = vsyncpa [#allocation6], 1
    %303 = vsyncpa [#allocation4], 1

</llo_original>
